<compile_context>
chip_gen: v6e
topology: v6e:2x2x1
jax: 0.10.0
libtpu: 0.0.40
codegen_flags: <defaults>
</compile_context>

<pallas_src>
import functools

import jax
import jax.numpy as jnp
from jax.experimental import pallas as pl
from jax.experimental.pallas import tpu as pltpu

RANK = 32  # hard-coded in LoRALinearLayer.__init__


def _round_up(x, m):
    return ((x + m - 1) // m) * m


def _vmem_budget_bytes():
    """Generation-aware VMEM budget (leave headroom for Mosaic internals)."""
    phys = None
    try:
        phys = pltpu.get_tpu_info().vmem_capacity_bytes
    except Exception:
        phys = None
    if not phys:
        try:
            kind = jax.devices()[0].device_kind.lower()
        except Exception:
            kind = ""
        phys = (64 << 20) if "v7" in kind else (128 << 20)
    # ~80% of physical: ~51 MiB on v7x, ~102 MiB on v5e/v6e.
    return int(phys * 0.8)


def _pick_tm(M):
    """Rows per M tile: single tile for small M, else cap padding at 12.5%."""
    if M <= 256:
        return _round_up(M, 8)
    for tm in (256, 128, 64):
        m_pad = _round_up(M, tm)
        if (m_pad - M) * 8 <= m_pad:  # padding waste <= 12.5%
            return tm
    return 64


def _step_vmem_bytes(tm, tn, in_dim, r, out_pad, itemsize, wbuf=2):
    """Per-step VMEM footprint estimate (streamed tiles use `wbuf` buffers)."""
    streamed = wbuf * (in_dim * tn + r * tn) * itemsize      # W^T, Wu^T tiles
    xio = 2 * (tm * in_dim + tm * tn) * itemsize             # x tile + out tile
    resident = 2 * (in_dim * r + out_pad) * itemsize         # Wd^T, bias
    scratch = tm * r * itemsize                              # down cache
    return streamed + xio + resident + scratch


def _pick_tn(out_pad, in_dim, r, tm, itemsize, budget):
    """Largest multiple of 128 dividing out_pad whose footprint fits budget."""
    n128 = out_pad // 128
    for k in range(n128, 0, -1):
        if n128 % k:
            continue
        tn = k * 128
        if _step_vmem_bytes(tm, tn, in_dim, r, out_pad, itemsize) <= budget:
            return tn
    return 128


def lora_linear_kernel(alpha_ref, x_ref, w_ref, b_ref, wd_ref, wu_ref,
                       o_ref, down_ref):
    """One (tm, tn) output tile of  x @ W^T + b + alpha * ((x @ Wd^T) @ Wu^T).

    alpha_ref : (1,)          SMEM
    x_ref     : (tm, IN)      VMEM  (same block for every OUT tile of an M tile)
    w_ref     : (IN, tn)      VMEM  (original weight, pre-transposed, OUT-tiled)
    b_ref     : (1, OUT_pad)  VMEM  (resident bias, sliced per j)
    wd_ref    : (IN, R)       VMEM  (lora_down weight, pre-transposed, resident)
    wu_ref    : (R, tn)       VMEM  (lora_up weight, pre-transposed, OUT-tiled)
    o_ref     : (tm, tn)      VMEM
    down_ref  : (tm, R)       VMEM scratch, INPUT dtype (alpha * x @ Wd cache)
    """
    j = pl.program_id(1)
    tn = o_ref.shape[1]

    # CORRECTNESS NOTE: this cache is only valid because OUT (axis 1) is the
    # INNERMOST grid axis -- the down projection is recomputed at j == 0 for
    # every M tile.  Do not reorder the grid without revisiting this.
    @pl.when(j == 0)
    def _():
        down = alpha_ref[0] * jnp.dot(
            x_ref[...], wd_ref[...], preferred_element_type=jnp.float32)
        down_ref[...] = down.astype(down_ref.dtype)

    base = jnp.dot(x_ref[...], w_ref[...], preferred_element_type=jnp.float32)
    up = jnp.dot(down_ref[...], wu_ref[...], preferred_element_type=jnp.float32)

    start = pl.multiple_of(j * tn, tn)
    bias = b_ref[:, pl.ds(start, tn)].astype(jnp.float32)

    # f32 epilogue, single cast at the final store.
    o_ref[...] = (base + bias + up).astype(o_ref.dtype)


def prepare_lora_linear_params(w, b, wd, wu):
    """One-time weight preparation (module state; OUTSIDE the per-call path).

    Transposes so the contraction dim is the sublane axis and the output
    feature dim is the lane axis, and pads OUT only to the next multiple of
    128 (lane-dense, zero wasted tile columns since tn divides OUT_pad).
    """
    OUT, IN = w.shape
    out_pad = _round_up(OUT, 128)
    pad_n = out_pad - OUT
    return dict(
        w_t=jnp.pad(w.T, ((0, 0), (0, pad_n))),              # (IN, OUT_pad)
        b=jnp.pad(b.reshape(1, OUT), ((0, 0), (0, pad_n))),   # (1, OUT_pad)
        wd_t=wd.T,                                            # (IN, R)
        wu_t=jnp.pad(wu.T, ((0, 0), (0, pad_n))),             # (R, OUT_pad)
        out_features=OUT,
    )


@functools.partial(jax.jit, static_argnames=("out_features",))
def _lora_linear_forward_2d(x2, w_t, b, wd_t, wu_t, alpha, *, out_features):
    M, IN = x2.shape
    OUT_pad = w_t.shape[1]
    R = wd_t.shape[1]
    itemsize = jnp.dtype(x2.dtype).itemsize

    budget = _vmem_budget_bytes()

    # --- tile selection (all static at trace time) ---
    tm = _pick_tm(M)
    M_pad = _round_up(M, tm)
    x_p = x2 if M_pad == M else jnp.pad(x2, ((0, M_pad - M), (0, 0)))

    tn = _pick_tn(OUT_pad, IN, R, tm, itemsize, int(budget * 0.7))

    grid = (M_pad // tm, OUT_pad // tn)

    # Deeper buffering on the streamed weight tiles only when clearly
    # mem-bound (small M tile, long j grid) and it still fits the budget.
    deep_ok = (tm <= 64 and grid[1] >= 3 and
               _step_vmem_bytes(tm, tn, IN, R, OUT_pad, itemsize, wbuf=3)
               <= int(budget * 0.7))
    if deep_ok:
        w_spec = pl.BlockSpec((IN, tn), lambda i, j: (0, j),
                              pipeline_mode=pl.Buffered(3))
        wu_spec = pl.BlockSpec((R, tn), lambda i, j: (0, j),
                               pipeline_mode=pl.Buffered(3))
        wbuf = 3
    else:
        w_spec = pl.BlockSpec((IN, tn), lambda i, j: (0, j))
        wu_spec = pl.BlockSpec((R, tn), lambda i, j: (0, j))
        wbuf = 2

    footprint = _step_vmem_bytes(tm, tn, IN, R, OUT_pad, itemsize, wbuf=wbuf)
    vmem_limit = int(min(max(footprint * 2, 8 << 20), budget))

    out = pl.pallas_call(
        lora_linear_kernel,
        out_shape=jax.ShapeDtypeStruct((M_pad, OUT_pad), x2.dtype),
        grid=grid,
        in_specs=[
            pl.BlockSpec(memory_space=pltpu.MemorySpace.SMEM),   # alpha (scalar)
            pl.BlockSpec((tm, IN), lambda i, j: (i, 0)),         # x (reused over j)
            w_spec,                                              # W^T tile
            pl.BlockSpec((1, OUT_pad), lambda i, j: (0, 0)),     # bias (resident)
            pl.BlockSpec((IN, R), lambda i, j: (0, 0)),          # Wd^T (resident)
            wu_spec,                                             # Wu^T tile
        ],
        out_specs=pl.BlockSpec((tm, tn), lambda i, j: (i, j)),
        scratch_shapes=[pltpu.VMEM((tm, R), x2.dtype)],          # down cache
        compiler_params=pltpu.CompilerParams(
            dimension_semantics=("parallel", "arbitrary"),
            vmem_limit_bytes=vmem_limit),
    )(alpha, x_p, w_t, b, wd_t, wu_t)

    # Skip the (extra HBM read+write) slice when no padding was added.
    if M_pad == M and OUT_pad == out_features:
        return out
    return out[:M, :out_features]


def lora_linear_forward(x, params, alpha):
    """x: (B, S, IN); params from prepare_lora_linear_params; alpha: (1,) f32.
    Returns (B, S, out_features)."""
    B, S, IN = x.shape
    out2 = _lora_linear_forward_2d(
        x.reshape(B * S, IN),
        params["w_t"], params["b"], params["wd_t"], params["wu_t"], alpha,
        out_features=params["out_features"])
    return out2.reshape(B, S, params["out_features"])


if __name__ == "__main__":
    key = jax.random.PRNGKey(0)
    k_x, k_w, k_b, k_q, k_up = jax.random.split(key, 5)

    # Small shapes consistent with the Linear branch of the module.
    B, S, IN, OUT, R = 2, 8, 64, 96, RANK

    x = jax.random.normal(k_x, (B, S, IN), dtype=jnp.float32)

    # Original nn.Linear(in_features=IN, out_features=OUT) parameters.
    w = 0.02 * jax.random.normal(k_w, (OUT, IN), dtype=jnp.float32)
    b = 0.01 * jax.random.normal(k_b, (OUT,), dtype=jnp.float32)

    # lora_down: rows of an orthogonal IN x IN matrix, divided by 2
    # (deterministic stand-in for orthogonal_mats/{IN}.npy + random row pick).
    q, _ = jnp.linalg.qr(jax.random.normal(k_q, (IN, IN), dtype=jnp.float32))
    idxs = jax.random.permutation(k_q, IN)[:R]
    wd = q[idxs] / 2.0                                   # (R, IN)

    # NOTE: the module zero-inits lora_up; use a small nonzero init here so
    # the LoRA path is numerically exercised by the test.
    wu = 0.05 * jax.random.normal(k_up, (OUT, R), dtype=jnp.float32)

    alpha = jnp.array([1.0], dtype=jnp.float32)          # alpha buffer (=1)

    # One-time weight prep (module state), then the hot-path forward.
    params = prepare_lora_linear_params(w, b, wd, wu)
    out = lora_linear_forward(x, params, alpha)
    jax.block_until_ready(out)

    # Pure-JAX reference of the PyTorch forward.
    ref = (x @ w.T + b) + alpha[0] * ((x @ wd.T) @ wu.T)
    assert out.shape == (B, S, OUT)
    assert jnp.allclose(out, ref, atol=1e-5, rtol=1e-5), "mismatch vs reference"

    print("KERNEL_OK")
</pallas_src>

<mosaic_0001>
module attributes {stable_mosaic.version = 11 : i64} {
  func.func @lora_linear_kernel(%arg0: i32, %arg1: i32, %arg2: memref<1xf32, #tpu.memory_space<smem>>, %arg3: memref<16x64xf32, #tpu.memory_space<vmem>>, %arg4: memref<64x128xf32, #tpu.memory_space<vmem>>, %arg5: memref<1x128xf32, #tpu.memory_space<vmem>>, %arg6: memref<64x32xf32, #tpu.memory_space<vmem>>, %arg7: memref<32x128xf32, #tpu.memory_space<vmem>>, %arg8: memref<16x128xf32, #tpu.memory_space<vmem>>, %arg9: memref<16x32xf32, #tpu.memory_space<vmem>>) attributes {dimension_semantics = [#tpu.dimension_semantics<parallel>, #tpu.dimension_semantics<arbitrary>], iteration_bounds = array<i64: 1, 1>, scalar_prefetch = 0 : i64, scratch_operands = 1 : i64, tpu.core_type = #tpu.core_type<tc>, window_params = [{transform_indices = @transform_0, window_bounds = array<i64: 1>}, {transform_indices = @transform_1, window_bounds = array<i64: 16, 64>}, {transform_indices = @transform_2, window_bounds = array<i64: 64, 128>}, {pipeline_mode = #tpu.pipeline_mode<synchronous>, transform_indices = @transform_3, window_bounds = array<i64: 1, 128>}, {pipeline_mode = #tpu.pipeline_mode<synchronous>, transform_indices = @transform_4, window_bounds = array<i64: 64, 32>}, {transform_indices = @transform_5, window_bounds = array<i64: 32, 128>}, {transform_indices = @transform_6, window_bounds = array<i64: 16, 128>}]} {
    %c0_i32 = arith.constant 0 : i32
    %0 = arith.cmpi eq, %arg1, %c0_i32 : i32
    %1 = arith.extui %0 : i1 to i32
    %c0_i32_0 = arith.constant 0 : i32
    %2 = arith.cmpi ne, %1, %c0_i32_0 : i32
    scf.if %2 {
      %c0_12 = arith.constant 0 : index
      %17 = memref.load %arg2[%c0_12] : memref<1xf32, #tpu.memory_space<smem>>
      %c0_13 = arith.constant 0 : index
      %c0_14 = arith.constant 0 : index
      %18 = vector.load %arg3[%c0_13, %c0_14] : memref<16x64xf32, #tpu.memory_space<vmem>>, vector<16x64xf32>
      %c0_15 = arith.constant 0 : index
      %c0_16 = arith.constant 0 : index
      %19 = vector.load %arg6[%c0_15, %c0_16] : memref<64x32xf32, #tpu.memory_space<vmem>>, vector<64x32xf32>
      %cst_17 = arith.constant dense<0.000000e+00> : vector<16x32xf32>
      %20 = tpu.matmul %18, %19, %cst_17 {dimension_numbers = #tpu.dot_dimension_numbers<[1], [0], [0], [1], [0, 0, 1, 1], [], []>} : vector<16x64xf32>, vector<64x32xf32>, vector<16x32xf32> -> vector<16x32xf32>
      %21 = vector.broadcast %17 : f32 to vector<16x32xf32>
      %22 = arith.mulf %21, %20 : vector<16x32xf32>
      %c0_18 = arith.constant 0 : index
      %c0_19 = arith.constant 0 : index
      %23 = vector.load %arg9[%c0_18, %c0_19] : memref<16x32xf32, #tpu.memory_space<vmem>>, vector<16x32xf32>
      tpu.vector_store %arg9[%c0_18, %c0_19], %22 {strides = array<i32>} : memref<16x32xf32, #tpu.memory_space<vmem>>, vector<16x32xf32>,
    } else {
    }
    %c0 = arith.constant 0 : index
    %c0_1 = arith.constant 0 : index
    %3 = vector.load %arg3[%c0, %c0_1] : memref<16x64xf32, #tpu.memory_space<vmem>>, vector<16x64xf32>
    %c0_2 = arith.constant 0 : index
    %c0_3 = arith.constant 0 : index
    %4 = vector.load %arg4[%c0_2, %c0_3] : memref<64x128xf32, #tpu.memory_space<vmem>>, vector<64x128xf32>
    %cst = arith.constant dense<0.000000e+00> : vector<16x128xf32>
    %5 = tpu.matmul %3, %4, %cst {dimension_numbers = #tpu.dot_dimension_numbers<[1], [0], [0], [1], [0, 0, 1, 1], [], []>} : vector<16x64xf32>, vector<64x128xf32>, vector<16x128xf32> -> vector<16x128xf32>
    %c0_4 = arith.constant 0 : index
    %c0_5 = arith.constant 0 : index
    %6 = vector.load %arg9[%c0_4, %c0_5] : memref<16x32xf32, #tpu.memory_space<vmem>>, vector<16x32xf32>
    %c0_6 = arith.constant 0 : index
    %c0_7 = arith.constant 0 : index
    %7 = vector.load %arg7[%c0_6, %c0_7] : memref<32x128xf32, #tpu.memory_space<vmem>>, vector<32x128xf32>
    %cst_8 = arith.constant dense<0.000000e+00> : vector<16x128xf32>
    %8 = tpu.matmul %6, %7, %cst_8 {dimension_numbers = #tpu.dot_dimension_numbers<[1], [0], [0], [1], [0, 0, 1, 1], [], []>} : vector<16x32xf32>, vector<32x128xf32>, vector<16x128xf32> -> vector<16x128xf32>
    %c128_i32 = arith.constant 128 : i32
    %9 = arith.muli %arg1, %c128_i32 : i32
    %10 = tpu.assume_multiple %9, 128 : i32
    %c0_9 = arith.constant 0 : index
    %11 = arith.index_cast %10 : i32 to index
    %12 = vector.load %arg5[%c0_9, %11] : memref<1x128xf32, #tpu.memory_space<vmem>>, vector<1x128xf32>
    %13 = vector.broadcast %12 : vector<1x128xf32> to vector<16x128xf32>
    %14 = arith.addf %5, %13 : vector<16x128xf32>
    %15 = arith.addf %14, %8 : vector<16x128xf32>
    %c0_10 = arith.constant 0 : index
    %c0_11 = arith.constant 0 : index
    %16 = vector.load %arg8[%c0_10, %c0_11] : memref<16x128xf32, #tpu.memory_space<vmem>>, vector<16x128xf32>
    tpu.vector_store %arg8[%c0_10, %c0_11], %15 {strides = array<i32>} : memref<16x128xf32, #tpu.memory_space<vmem>>, vector<16x128xf32>,
    return
  }
  func.func @transform_0(%arg0: i32, %arg1: i32) -> i32 {
    %c0_i32 = arith.constant 0 : i32
    %c0_i32_0 = arith.constant 0 : i32
    return %c0_i32 : i32
  }
  func.func @transform_1(%arg0: i32, %arg1: i32) -> (i32, i32) {
    %c0_i32 = arith.constant 0 : i32
    %c0_i32_0 = arith.constant 0 : i32
    return %arg0, %c0_i32 : i32, i32
  }
  func.func @transform_2(%arg0: i32, %arg1: i32) -> (i32, i32) {
    %c0_i32 = arith.constant 0 : i32
    %c0_i32_0 = arith.constant 0 : i32
    return %c0_i32, %arg1 : i32, i32
  }
  func.func @transform_3(%arg0: i32, %arg1: i32) -> (i32, i32) {
    %c0_i32 = arith.constant 0 : i32
    %c0_i32_0 = arith.constant 0 : i32
    %c0_i32_1 = arith.constant 0 : i32
    return %c0_i32, %c0_i32_0 : i32, i32
  }
  func.func @transform_4(%arg0: i32, %arg1: i32) -> (i32, i32) {
    %c0_i32 = arith.constant 0 : i32
    %c0_i32_0 = arith.constant 0 : i32
    %c0_i32_1 = arith.constant 0 : i32
    return %c0_i32, %c0_i32_0 : i32, i32
  }
  func.func @transform_5(%arg0: i32, %arg1: i32) -> (i32, i32) {
    %c0_i32 = arith.constant 0 : i32
    %c0_i32_0 = arith.constant 0 : i32
    return %c0_i32, %arg1 : i32, i32
  }
  func.func @transform_6(%arg0: i32, %arg1: i32) -> (i32, i32) {
    %c0_i32 = arith.constant 0 : i32
    return %arg0, %arg1 : i32, i32
  }
}

</mosaic_0001>

<llo_original>
// kernel: _lora_linear_forward_2d.1
$region0: #{_lora_linear_forward_2d.1}
  #allocation0 [shape = 'u32[]', space=smem, size = 0x4, offset = 0x4, fixed_abs, tag = 'smem constant byte address 0x4 - core index']
  #allocation1 [shape = 'u32[144,128]{1,0:T(1,128)}', space=vmem, size = 0x12000, scoped, tag = 'internal scratch']
  #allocation2 [shape = 'f32[16,32]{1,0:T(8,128)}', space=vmem, size = 0x2000, scoped, tag = 'scratch operand']
  #allocation3 [shape = 'f32[1]{0:T(128)S(6)}', space=smem, size = 0x200, scoped, tag = 'scoped memory for _lora_linear_forward_2d.1']
  %s0 = inlined_call_operand.<no memory space> [shape: f32[1], index: 0, kind: input, shape index: {}]
  %s1 = inlined_call_operand.hbm [shape: f32[16,64], index: 1, kind: input, shape index: {}]
  %s2 = inlined_call_operand.vmem [shape: f32[64,128], index: 2, kind: input, shape index: {}]
  %s3 = inlined_call_operand.vmem [shape: f32[1,128], index: 3, kind: input, shape index: {}]
  %s4 = inlined_call_operand.vmem [shape: f32[64,32], index: 4, kind: input, shape index: {}]
  %s5 = inlined_call_operand.vmem [shape: f32[32,128], index: 5, kind: input, shape index: {}]
  %s6 = inlined_call_operand.hbm [shape: f32[16,128], index: 6, kind: output, shape index: {}]
  %s7 = sld [smem:[#allocation0]]
  $region42: #{_lora_linear_forward_2d.1} parent=0
    _
  %s9 = ssub.s32 1, %s7
  %s10 = scalar_select 0, %s9, %s7
  %11 = sst [smem:[#allocation3]] %s0
  $region1: #{_lora_linear_forward_2d.1} parent=0
    #allocation4 [shape = 'u8[8192]{0}', space=vmem, size = 0x2000, scoped, tag = 'input window, operand 1, single buffered']
    #allocation5 [shape = 's32[1]{0}', space=sflag, size = 0x4, scoped, tag = 'scoped memory for _lora_linear_forward_2d.1']
    #allocation6 [shape = 's32[1]{0}', space=sflag, size = 0x4, scoped, tag = 'scoped memory for _lora_linear_forward_2d.1']
    #allocation7 [shape = 'u8[8192]{0}', space=vmem, size = 0x2000, scoped, tag = 'output window, operand 0, single buffered']
    %12 = vsyncpa [#allocation5], 0
    %13 = vsyncpa [#allocation6], 0
    // Predicated region
    $region2: #{_lora_linear_forward_2d.1} parent=1 // pred_check
      _
    $region3: #{_lora_linear_forward_2d.1} parent=1 // pred_check_branch
      %15 = sbr.rel (0) target = $region5
    $region4: #{_lora_linear_forward_2d.1} parent=1 // pred_region
      _
    $region5: #{_lora_linear_forward_2d.1} parent=1 // pred_fallthru
      _
    // Predicated region
    $region6: #{_lora_linear_forward_2d.1} parent=1 // pred_check
      _
    $region7: #{_lora_linear_forward_2d.1} parent=1 // pred_check_branch
      %17 = sbr.rel (0) target = $region9
    $region8: #{_lora_linear_forward_2d.1} parent=1 // pred_region
      %s19 = ssub.s32 256, 256
      %20 = vsyncadd [#allocation5], %s19
      %s21 = sshll.u32 [#allocation4], 4
      %s22 = int_to_ptr.vmem [resolvable:$true] %s21
      %27 = dma.hbm_to_vmem [thread:$0]  %s1, 256, %s22, [#allocation5], 128, 128, 8
    $region9: #{_lora_linear_forward_2d.1} parent=1 // pred_fallthru
      _
    // Predicated region
    $region10: #{_lora_linear_forward_2d.1} parent=1 // pred_check
      _
    $region11: #{_lora_linear_forward_2d.1} parent=1 // pred_check_branch
      %29 = sbr.rel (0) target = $region13
    $region12: #{_lora_linear_forward_2d.1} parent=1 // pred_region
      _
    $region13: #{_lora_linear_forward_2d.1} parent=1 // pred_fallthru
      _
    // Predicated region
    $region14: #{_lora_linear_forward_2d.1} parent=1 // pred_check
      _
    $region15: #{_lora_linear_forward_2d.1} parent=1 // pred_check_branch
      %31 = sbr.rel (0) target = $region17
    $region16: #{_lora_linear_forward_2d.1} parent=1 // pred_region
      _
    $region17: #{_lora_linear_forward_2d.1} parent=1 // pred_fallthru
      _
    // Predicated region
    $region18: #{_lora_linear_forward_2d.1} parent=1 // pred_check
      _
    $region19: #{_lora_linear_forward_2d.1} parent=1 // pred_check_branch
      %33 = sbr.rel (0) target = $region21
    $region20: #{_lora_linear_forward_2d.1} parent=1 // pred_region
      _
    $region21: #{_lora_linear_forward_2d.1} parent=1 // pred_fallthru
      _
    // Predicated region
    $region22: #{_lora_linear_forward_2d.1} parent=1 // pred_check
      _
    $region23: #{_lora_linear_forward_2d.1} parent=1 // pred_check_branch
      %35 = sbr.rel (0) target = $region25
    $region24: #{_lora_linear_forward_2d.1} parent=1 // pred_region
      _
    $region25: #{_lora_linear_forward_2d.1} parent=1 // pred_fallthru
      _
    // Predicated region
    $region26: #{_lora_linear_forward_2d.1} parent=1 // pred_check
      _
    $region27: #{_lora_linear_forward_2d.1} parent=1 // pred_check_branch
      %37 = sbr.rel (0) target = $region29
    $region28: #{_lora_linear_forward_2d.1} parent=1 // pred_region
      %38 = dma.done [#allocation5], 256
    $region29: #{_lora_linear_forward_2d.1} parent=1 // pred_fallthru
      _
    %p39 = scmp.eq.s32.totalorder 0, 0
    // Predicated region
    $region30: #{_lora_linear_forward_2d.1} parent=1 // pred_check
      %p40 = pneg %p39
    $region31: #{_lora_linear_forward_2d.1} parent=1 // pred_check_branch
      %42 = sbr.rel (%p40) target = $region33
    $region32: #{_lora_linear_forward_2d.1} parent=1 // pred_region
      %s43 = sld [smem:[#allocation3]]
      %v44 = vld [vmem:[#allocation4] sm:$0xff]
      %v45 = vld [vmem:[#allocation4 + $0x8] sm:$0xff]
      %v46 = vld [vmem:[%s4] sm:$0xff]
      %v47 = vld [vmem:[%s4 + $0x8] sm:$0xff]
      %v48 = vld [vmem:[%s4 + $0x10] sm:$0xff]
      %v49 = vld [vmem:[%s4 + $0x18] sm:$0xff]
      %v50 = vld [vmem:[%s4 + $0x20] sm:$0xff]
      %v51 = vld [vmem:[%s4 + $0x28] sm:$0xff]
      %v52 = vld [vmem:[%s4 + $0x30] sm:$0xff]
      %v53 = vld [vmem:[%s4 + $0x38] sm:$0xff]
      %vm54 = vcmask 523264
      %v56 = vsel %vm54, %v44, 0
      %v59 = vsel %vm54, %v45, 0
      %61 = vmatprep.subr.mxu0 0.0
      %62 = vmatpush1.msra.mxu0 0.0
      %63 = vmatprep.subr.mxu0 0.0
      %64 = vmatpush1.msra.mxu0 0.0
      %65 = vmatprep.subr.mxu0 0.0
      %66 = vmatpush1.msra.mxu0 0.0
      %67 = vmatprep.subr.mxu0 0.0
      %68 = vmatpush1.msra.mxu0 0.0
      %69 = vmatprep.subr.mxu0 0.0
      %70 = vmatpush1.msra.mxu0 0.0
      %71 = vmatprep.subr.mxu0 0.0
      %72 = vmatpush1.msra.mxu0 0.0
      %73 = vmatprep.subr.mxu0 0.0
      %74 = vmatpush1.msra.mxu0 0.0
      %75 = vmatprep.subr.mxu0 0.0
      %76 = vmatpush1.msra.mxu0 0.0
      %77 = vmatprep.subr.mxu0 0.0
      %78 = vmatpush1.msra.mxu0 %v53
      %79 = vmatprep.subr.mxu0 0.0
      %80 = vmatpush1.msra.mxu0 %v52
      %81 = vmatprep.subr.mxu0 0.0
      %82 = vmatpush1.msra.mxu0 %v51
      %83 = vmatprep.subr.mxu0 0.0
      %84 = vmatpush1.msra.mxu0 %v50
      %85 = vmatprep.subr.mxu0 0.0
      %86 = vmatpush1.msra.mxu0 %v49
      %87 = vmatprep.subr.mxu0 0.0
      %88 = vmatpush1.msra.mxu0 %v48
      %89 = vmatprep.subr.mxu0 0.0
      %90 = vmatpush1.msra.mxu0 %v47
      %91 = vmatprep.subr.mxu0 0.0
      %92 = vmatpush1.msra.mxu0 %v46
      %93 = vmatprep.subr.mxu0 0.0
      %94 = vmatpush2.msra.mxu0 0.0
      %95 = vmatprep.subr.mxu0 0.0
      %96 = vmatpush2.msra.mxu0 0.0
      %97 = vmatprep.subr.mxu0 0.0
      %98 = vmatpush2.msra.mxu0 0.0
      %99 = vmatprep.subr.mxu0 0.0
      %100 = vmatpush2.msra.mxu0 0.0
      %101 = vmatprep.subr.mxu0 0.0
      %102 = vmatpush2.msra.mxu0 0.0
      %103 = vmatprep.subr.mxu0 0.0
      %104 = vmatpush2.msra.mxu0 0.0
      %105 = vmatprep.subr.mxu0 0.0
      %106 = vmatpush2.msra.mxu0 0.0
      %107 = vmatprep.subr.mxu0 0.0
      %108 = vmatpush2.msra.mxu0 0.0
      %109 = vmatprep.subr.mxu0 0.0
      %110 = vmatpush2.msra.mxu0 0.0
      %111 = vmatprep.subr.mxu0 0.0
      %112 = vmatpush2.msra.mxu0 0.0
      %113 = vmatprep.subr.mxu0 0.0
      %114 = vmatpush2.msra.mxu0 0.0
      %115 = vmatprep.subr.mxu0 0.0
      %116 = vmatpush2.msra.mxu0 0.0
      %117 = vmatprep.subr.mxu0 0.0
      %118 = vmatpush2.msra.mxu0 0.0
      %119 = vmatprep.subr.mxu0 0.0
      %120 = vmatpush2.msra.mxu0 0.0
      %121 = vmatprep.subr.mxu0 0.0
      %122 = vmatpush2.msra.mxu0 0.0
      %123 = vmatprep.subr.mxu0 0.0
      %124 = vmatpush2.msra.mxu0 0.0
      %125 = vmatprep.mubr.f32.mxu0 0.0
      %126 = vmatmul.mubr.f32.gmra.mxu0 %v56
      %v127 = vpop.f32.mrf.mxu0
      %v128 = vadd.f32 0.0, %v127
      %v129 = vpop.f32.mrf.mxu0
      %130 = vmatprep.mubr.f32.mxu0 0.0
      %131 = vmatmul.mubr.f32.gmra.mxu0 %v59
      %v132 = vpop.f32.mrf.mxu0
      %v133 = vadd.f32 0.0, %v132
      %v134 = vpop.f32.mrf.mxu0
      %135 = vdwg.mxu0
      %v136 = vstv %s43
      %v137 = vmul.f32 %v136, %v128
      %v138 = vmul.f32 %v136, %v133
      %vm139 = vcmask 261120
      %140 = vst.msk [vmem:[#allocation2] sm:$0xff] %vm139, %v137
      %141 = vst.msk [vmem:[#allocation2 + $0x8] sm:$0xff] %vm139, %v138
    $region33: #{_lora_linear_forward_2d.1} parent=1 // pred_fallthru
      _
    %v142 = vld [vmem:[#allocation4] sm:$0xff]
    %v143 = vld [vmem:[#allocation4 + $0x8] sm:$0xff]
    %v144 = vld [vmem:[%s2] sm:$0xff]
    %v145 = vld [vmem:[%s2 + $0x8] sm:$0xff]
    %v146 = vld [vmem:[%s2 + $0x10] sm:$0xff]
    %v147 = vld [vmem:[%s2 + $0x18] sm:$0xff]
    %v148 = vld [vmem:[%s2 + $0x20] sm:$0xff]
    %v149 = vld [vmem:[%s2 + $0x28] sm:$0xff]
    %v150 = vld [vmem:[%s2 + $0x30] sm:$0xff]
    %v151 = vld [vmem:[%s2 + $0x38] sm:$0xff]
    %v152 = vld [vmem:[#allocation2] sm:$0xff]
    %v153 = vld [vmem:[#allocation2 + $0x8] sm:$0xff]
    %v154 = vld [vmem:[%s5] sm:$0xff]
    %v155 = vld [vmem:[%s5 + $0x8] sm:$0xff]
    %v156 = vld [vmem:[%s5 + $0x10] sm:$0xff]
    %v157 = vld [vmem:[%s5 + $0x18] sm:$0xff]
    %vm158 = vcmask 261120
    %v160 = vsel %vm158, %v152, 0
    %v163 = vsel %vm158, %v153, 0
    %165 = vmatprep.subr.mxu0 0.0
    %166 = vmatpush1.msra.mxu0 0.0
    %167 = vmatprep.subr.mxu0 0.0
    %168 = vmatpush1.msra.mxu0 0.0
    %169 = vmatprep.subr.mxu0 0.0
    %170 = vmatpush1.msra.mxu0 0.0
    %171 = vmatprep.subr.mxu0 0.0
    %172 = vmatpush1.msra.mxu0 0.0
    %173 = vmatprep.subr.mxu0 0.0
    %174 = vmatpush1.msra.mxu0 0.0
    %175 = vmatprep.subr.mxu0 0.0
    %176 = vmatpush1.msra.mxu0 0.0
    %177 = vmatprep.subr.mxu0 0.0
    %178 = vmatpush1.msra.mxu0 0.0
    %179 = vmatprep.subr.mxu0 0.0
    %180 = vmatpush1.msra.mxu0 0.0
    %181 = vmatprep.subr.mxu0 0.0
    %182 = vmatpush1.msra.mxu0 0.0
    %183 = vmatprep.subr.mxu0 0.0
    %184 = vmatpush1.msra.mxu0 0.0
    %185 = vmatprep.subr.mxu0 0.0
    %186 = vmatpush1.msra.mxu0 0.0
    %187 = vmatprep.subr.mxu0 0.0
    %188 = vmatpush1.msra.mxu0 0.0
    %189 = vmatprep.subr.mxu0 0.0
    %190 = vmatpush1.msra.mxu0 %v157
    %191 = vmatprep.subr.mxu0 0.0
    %192 = vmatpush1.msra.mxu0 %v156
    %193 = vmatprep.subr.mxu0 0.0
    %194 = vmatpush1.msra.mxu0 %v155
    %195 = vmatprep.subr.mxu0 0.0
    %196 = vmatpush1.msra.mxu0 %v154
    %197 = vmatprep.subr.mxu0 0.0
    %198 = vmatpush2.msra.mxu0 0.0
    %199 = vmatprep.subr.mxu0 0.0
    %200 = vmatpush2.msra.mxu0 0.0
    %201 = vmatprep.subr.mxu0 0.0
    %202 = vmatpush2.msra.mxu0 0.0
    %203 = vmatprep.subr.mxu0 0.0
    %204 = vmatpush2.msra.mxu0 0.0
    %205 = vmatprep.subr.mxu0 0.0
    %206 = vmatpush2.msra.mxu0 0.0
    %207 = vmatprep.subr.mxu0 0.0
    %208 = vmatpush2.msra.mxu0 0.0
    %209 = vmatprep.subr.mxu0 0.0
    %210 = vmatpush2.msra.mxu0 0.0
    %211 = vmatprep.subr.mxu0 0.0
    %212 = vmatpush2.msra.mxu0 0.0
    %213 = vmatprep.subr.mxu0 0.0
    %214 = vmatpush2.msra.mxu0 0.0
    %215 = vmatprep.subr.mxu0 0.0
    %216 = vmatpush2.msra.mxu0 0.0
    %217 = vmatprep.subr.mxu0 0.0
    %218 = vmatpush2.msra.mxu0 0.0
    %219 = vmatprep.subr.mxu0 0.0
    %220 = vmatpush2.msra.mxu0 0.0
    %221 = vmatprep.subr.mxu0 0.0
    %222 = vmatpush2.msra.mxu0 0.0
    %223 = vmatprep.subr.mxu0 0.0
    %224 = vmatpush2.msra.mxu0 0.0
    %225 = vmatprep.subr.mxu0 0.0
    %226 = vmatpush2.msra.mxu0 0.0
    %227 = vmatprep.subr.mxu0 0.0
    %228 = vmatpush2.msra.mxu0 0.0
    %229 = vmatprep.mubr.f32.mxu0 0.0
    %230 = vmatmul.mubr.f32.gmra.mxu0 %v160
    %v231 = vpop.f32.mrf.mxu0
    %v232 = vadd.f32 0.0, %v231
    %v233 = vpop.f32.mrf.mxu0
    %234 = vmatprep.mubr.f32.mxu0 0.0
    %235 = vmatmul.mubr.f32.gmra.mxu0 %v163
    %v236 = vpop.f32.mrf.mxu0
    %v237 = vadd.f32 0.0, %v236
    %v238 = vpop.f32.mrf.mxu0
    %239 = vdwg.mxu0
    %s240 = smul.u32 0, 128
    %s241 = sshra.s32 %s240, 7
    %s242 = sand.u32 %s240, 127
    %s243 = scalar_lea.vmem %s3, %s241
    %v244 = vld [vmem:[%s243] sm:$0x1]
    %v246 = vlaneseq
    %v247 = vshrl.u32 %v246, 7
    %v248 = vsub.s32 0, %v247
    %v249 = vrot.slane %v244, %v248
    %vm251 = vcmask 523264
    %v253 = vsel %vm251, %v142, 0
    %v256 = vsel %vm251, %v143, 0
    %258 = vmatprep.subr.mxu0 0.0
    %259 = vmatpush1.msra.mxu0 0.0
    %260 = vmatprep.subr.mxu0 0.0
    %261 = vmatpush1.msra.mxu0 0.0
    %262 = vmatprep.subr.mxu0 0.0
    %263 = vmatpush1.msra.mxu0 0.0
    %264 = vmatprep.subr.mxu0 0.0
    %265 = vmatpush1.msra.mxu0 0.0
    %266 = vmatprep.subr.mxu0 0.0
    %267 = vmatpush1.msra.mxu0 0.0
    %268 = vmatprep.subr.mxu0 0.0
    %269 = vmatpush1.msra.mxu0 0.0
    %270 = vmatprep.subr.mxu0 0.0
    %271 = vmatpush1.msra.mxu0 0.0
    %272 = vmatprep.subr.mxu0 0.0
    %273 = vmatpush1.msra.mxu0 0.0
    %274 = vmatprep.subr.mxu0 0.0
    %275 = vmatpush1.msra.mxu0 %v151
    %276 = vmatprep.subr.mxu0 0.0
    %277 = vmatpush1.msra.mxu0 %v150
    %278 = vmatprep.subr.mxu0 0.0
    %279 = vmatpush1.msra.mxu0 %v149
    %280 = vmatprep.subr.mxu0 0.0
    %281 = vmatpush1.msra.mxu0 %v148
    %282 = vmatprep.subr.mxu0 0.0
    %283 = vmatpush1.msra.mxu0 %v147
    %284 = vmatprep.subr.mxu0 0.0
    %285 = vmatpush1.msra.mxu0 %v146
    %286 = vmatprep.subr.mxu0 0.0
    %287 = vmatpush1.msra.mxu0 %v145
    %288 = vmatprep.subr.mxu0 0.0
    %289 = vmatpush1.msra.mxu0 %v144
    %290 = vmatprep.subr.mxu0 0.0
    %291 = vmatpush2.msra.mxu0 0.0
    %292 = vmatprep.subr.mxu0 0.0
    %293 = vmatpush2.msra.mxu0 0.0
    %294 = vmatprep.subr.mxu0 0.0
    %295 = vmatpush2.msra.mxu0 0.0
    %296 = vmatprep.subr.mxu0 0.0
    %297 = vmatpush2.msra.mxu0 0.0
    %298 = vmatprep.subr.mxu0 0.0
    %299 = vmatpush2.msra.mxu0 0.0
    %300 = vmatprep.subr.mxu0 0.0
    %301 = vmatpush2.msra.mxu0 0.0
    %302 = vmatprep.subr.mxu0 0.0
    %303 = vmatpush2.msra.mxu0 0.0
    %304 = vmatprep.subr.mxu0 0.0
    %305 = vmatpush2.msra.mxu0 0.0
    %306 = vmatprep.subr.mxu0 0.0
    %307 = vmatpush2.msra.mxu0 0.0
    %308 = vmatprep.subr.mxu0 0.0
    %309 = vmatpush2.msra.mxu0 0.0
    %310 = vmatprep.subr.mxu0 0.0
    %311 = vmatpush2.msra.mxu0 0.0
    %312 = vmatprep.subr.mxu0 0.0
    %313 = vmatpush2.msra.mxu0 0.0
    %314 = vmatprep.subr.mxu0 0.0
    %315 = vmatpush2.msra.mxu0 0.0
    %316 = vmatprep.subr.mxu0 0.0
    %317 = vmatpush2.msra.mxu0 0.0
    %318 = vmatprep.subr.mxu0 0.0
    %319 = vmatpush2.msra.mxu0 0.0
    %320 = vmatprep.subr.mxu0 0.0
    %321 = vmatpush2.msra.mxu0 0.0
    %322 = vmatprep.mubr.f32.mxu0 0.0
    %323 = vmatmul.mubr.f32.gmra.mxu0 %v253
    %v324 = vpop.f32.mrf.mxu0
    %v325 = vadd.f32 %v249, %v324
    %v326 = vpop.f32.mrf.mxu0
    %327 = vmatprep.mubr.f32.mxu0 0.0
    %328 = vmatmul.mubr.f32.gmra.mxu0 %v256
    %v329 = vpop.f32.mrf.mxu0
    %v330 = vadd.f32 %v249, %v329
    %v331 = vpop.f32.mrf.mxu0
    %332 = vdwg.mxu0
    %v333 = vadd.f32 %v325, %v232
    %v334 = vadd.f32 %v330, %v237
    %335 = vst [vmem:[#allocation7] sm:$0xff] %v333
    %336 = vst [vmem:[#allocation7 + $0x8] sm:$0xff] %v334
    // Predicated region
    $region34: #{_lora_linear_forward_2d.1} parent=1 // pred_check
      _
    $region35: #{_lora_linear_forward_2d.1} parent=1 // pred_check_branch
      %338 = sbr.rel (0) target = $region37
    $region36: #{_lora_linear_forward_2d.1} parent=1 // pred_region
      %s340 = ssub.s32 256, 256
      %341 = vsyncadd [#allocation6], %s340
      %s342 = sshll.u32 [#allocation7], 4
      %s343 = int_to_ptr.vmem [resolvable:$true] %s342
      %348 = dma.vmem_to_hbm [thread:$0]  %s343, 256, %s6, [#allocation6], 128, 128, 8
    $region37: #{_lora_linear_forward_2d.1} parent=1 // pred_fallthru
      _
    // Predicated region
    $region38: #{_lora_linear_forward_2d.1} parent=1 // pred_check
      _
    $region39: #{_lora_linear_forward_2d.1} parent=1 // pred_check_branch
      %350 = sbr.rel (0) target = $region41
    $region40: #{_lora_linear_forward_2d.1} parent=1 // pred_region
      %351 = dma.done [#allocation6], 256
    $region41: #{_lora_linear_forward_2d.1} parent=1 // pred_fallthru
      _
    %352 = vsyncpa [#allocation5], 1
    %353 = vsyncpa [#allocation6], 1

</llo_original>
